<compile_context>
chip_gen: v7x
topology: tpu7x:2x2x1
jax: 0.10.0
libtpu: 0.0.40
codegen_flags: <defaults>
</compile_context>

<pallas_src>
import jax
import jax.numpy as jnp
from jax import lax
from jax.experimental import pallas as pl
from jax.experimental.pallas import tpu as pltpu


_VMEM_LIMIT_BYTES = 48 * 1024 * 1024            # within v7x 64 MiB/TC; raise on v5e/v6e
_VMEM_INPUT_BUDGET = int(_VMEM_LIMIT_BYTES * 0.70)   # double-buffered input plan + headroom


def _round_up(a, b):
    return (a + b - 1) // b * b


def _make_single_pass_kernel(inv_hw):
    """Whole spatial extent fits in one block: one reduce + lane-dense store."""

    def kernel(x_ref, out_ref):
        x = x_ref[...]                                        # (tile_r, hw), native dtype
        s = jnp.sum(x, axis=-1, dtype=jnp.float32)            # (tile_r,) f32 accumulation
        m = jnp.max(x, axis=-1)                               # (tile_r,) exact in native dtype
        out_ref[0, :] = (s * inv_hw).astype(out_ref.dtype)    # avg row (lane-dense)
        out_ref[1, :] = m.astype(out_ref.dtype)               # max row (lane-dense)

    return kernel


def _make_hw_tiled_kernel(inv_hw, hw, tile_hw, mask_needed, neg_fill):
    """Huge spatial extent: tile H*W along the grid's last ('arbitrary') axis."""

    def kernel(x_ref, out_ref, sum_ref, max_ref):
        k = pl.program_id(1)
        x = x_ref[...]                                        # (tile_r, tile_hw)

        if mask_needed:
            lane = lax.broadcasted_iota(jnp.int32, x.shape, 1)
            valid = (k * tile_hw + lane) < hw
            xs = jnp.where(valid, x, jnp.zeros_like(x))
            xm = jnp.where(valid, x, jnp.full_like(x, neg_fill))
        else:
            xs = x
            xm = x

        psum = jnp.sum(xs, axis=-1, keepdims=True, dtype=jnp.float32)    # (tile_r, 1)
        pmax = jnp.max(xm, axis=-1, keepdims=True).astype(jnp.float32)   # (tile_r, 1)

        @pl.when(k == 0)
        def _():
            sum_ref[...] = psum
            max_ref[...] = pmax

        @pl.when(k > 0)
        def _():
            sum_ref[...] = sum_ref[...] + psum
            max_ref[...] = jnp.maximum(max_ref[...], pmax)

        @pl.when(k == pl.num_programs(1) - 1)
        def _():
            out_ref[0, :] = (sum_ref[:, 0] * inv_hw).astype(out_ref.dtype)
            out_ref[1, :] = max_ref[:, 0].astype(out_ref.dtype)

    return kernel


def adaptive_concat_pool2d(x):
    """x: (N, C, H, W) -> (N, 2*C, 1, 1), matching torch.cat([avg, max], dim=1)."""
    N, C, H, W = x.shape
    rows = N * C
    hw = H * W
    x2d = x.reshape(rows, hw)                       # contiguous view; no extra HBM pass

    itemsize = jnp.dtype(x.dtype).itemsize          # native itemsize (no f32 inflation)
    hw_lanes = _round_up(hw, 128)                   # lane-padded VMEM row width
    bytes_per_row = hw_lanes * itemsize
    fit_rows = _VMEM_INPUT_BUDGET // (2 * bytes_per_row)   # 2 = double-buffered input

    inv_hw = 1.0 / float(hw)
    out_shape = jax.ShapeDtypeStruct((2, rows), x.dtype)   # row 0 = avg, row 1 = max

    if fit_rows >= min(rows, 128):
        # ---------------- common path: whole spatial extent per block ----------------
        if fit_rows >= rows:
            if rows >= 256:
                # split into >= 2 tiles so v7x's two TensorCores both get work
                tile_r = _round_up(-(-rows // 2), 128)
            else:
                tile_r = rows                        # full extent (exempt from 128 rule)
        else:
            tile_r = (fit_rows // 128) * 128         # >= 128 in this branch

        grid = (pl.cdiv(rows, tile_r),)
        out2 = pl.pallas_call(
            _make_single_pass_kernel(inv_hw),
            out_shape=out_shape,
            grid_spec=pltpu.PrefetchScalarGridSpec(
                num_scalar_prefetch=0,
                grid=grid,
                in_specs=[pl.BlockSpec((tile_r, hw), lambda i: (i, 0))],
                out_specs=pl.BlockSpec((2, tile_r), lambda i: (0, i)),
            ),
            compiler_params=pltpu.CompilerParams(
                dimension_semantics=("parallel",),
                vmem_limit_bytes=_VMEM_LIMIT_BYTES,
            ),
        )(x2d)
    else:
        # ------------- fallback: huge H*W, tile the spatial (reduction) axis ----------
        tile_r = min(rows, 128)
        tile_hw = (_VMEM_INPUT_BUDGET // (2 * tile_r * itemsize) // 128) * 128
        tile_hw = max(128, min(tile_hw, hw_lanes))
        mask_needed = (hw % tile_hw) != 0
        neg_fill = (-jnp.inf if jnp.issubdtype(x.dtype, jnp.floating)
                    else jnp.iinfo(x.dtype).min)
        grid = (pl.cdiv(rows, tile_r), pl.cdiv(hw, tile_hw))
        out2 = pl.pallas_call(
            _make_hw_tiled_kernel(inv_hw, hw, tile_hw, mask_needed, neg_fill),
            out_shape=out_shape,
            grid_spec=pltpu.PrefetchScalarGridSpec(
                num_scalar_prefetch=0,
                grid=grid,
                in_specs=[pl.BlockSpec((tile_r, tile_hw), lambda i, k: (i, k))],
                out_specs=pl.BlockSpec((2, tile_r), lambda i, k: (0, i)),
                scratch_shapes=[pltpu.VMEM((tile_r, 1), jnp.float32),
                                pltpu.VMEM((tile_r, 1), jnp.float32)],
            ),
            compiler_params=pltpu.CompilerParams(
                dimension_semantics=("parallel", "arbitrary"),
                vmem_limit_bytes=_VMEM_LIMIT_BYTES,
            ),
        )(x2d)

    avg = out2[0].reshape(N, C, 1, 1)
    mx = out2[1].reshape(N, C, 1, 1)
    return jnp.concatenate([avg, mx], axis=1)


if __name__ == "__main__":
    key = jax.random.PRNGKey(0)
    # Small NCHW input consistent with the module's forward.
    x = jax.random.normal(key, (2, 4, 16, 16), dtype=jnp.float32)

    out = adaptive_concat_pool2d(x)
    out = jax.block_until_ready(out)

    # Reference check in plain JAX (same semantics as the PyTorch module).
    ref = jnp.concatenate(
        [
            jnp.mean(x, axis=(2, 3), keepdims=True),
            jnp.max(x, axis=(2, 3), keepdims=True),
        ],
        axis=1,
    )
    assert out.shape == (2, 8, 1, 1), out.shape
    assert jnp.allclose(out, ref, atol=1e-5, rtol=1e-5)

    print("KERNEL_OK")
</pallas_src>

<mosaic_0001>
module attributes {stable_mosaic.version = 11 : i64} {
  func.func @kernel(%arg0: i32, %arg1: memref<8x256xf32, #tpu.memory_space<vmem>>, %arg2: memref<2x8xf32, #tpu.memory_space<vmem>>) attributes {dimension_semantics = [#tpu.dimension_semantics<parallel>], iteration_bounds = array<i64: 1>, scalar_prefetch = 0 : i64, scratch_operands = 0 : i64, tpu.core_type = #tpu.core_type<tc>, window_params = [{transform_indices = @transform_0, window_bounds = array<i64: 8, 256>}, {transform_indices = @transform_1, window_bounds = array<i64: 2, 8>}]} {
    %c0 = arith.constant 0 : index
    %c0_0 = arith.constant 0 : index
    %0 = vector.load %arg1[%c0, %c0_0] : memref<8x256xf32, #tpu.memory_space<vmem>>, vector<8x256xf32>
    %cst = arith.constant dense<0.000000e+00> : vector<8xf32>
    %1 = vector.multi_reduction <add>, %0, %cst [1] : vector<8x256xf32> to vector<8xf32>
    %cst_1 = arith.constant dense<0xFF800000> : vector<8xf32>
    %2 = vector.multi_reduction <maximumf>, %0, %cst_1 [1] : vector<8x256xf32> to vector<8xf32>
    %cst_2 = arith.constant 3.906250e-03 : f32
    %3 = vector.broadcast %cst_2 : f32 to vector<8xf32>
    %4 = arith.mulf %1, %3 : vector<8xf32>
    %c0_3 = arith.constant 0 : index
    %c0_4 = arith.constant 0 : index
    %5 = vector.load %arg2[%c0_3, %c0_4] : memref<2x8xf32, #tpu.memory_space<vmem>>, vector<1x8xf32>
    %6 = vector.shape_cast %5 : vector<1x8xf32> to vector<8xf32>
    %7 = vector.shape_cast %4 : vector<8xf32> to vector<1x8xf32>
    tpu.vector_store %arg2[%c0_3, %c0_4], %7 {strides = array<i32>} : memref<2x8xf32, #tpu.memory_space<vmem>>, vector<1x8xf32>,
    %c1 = arith.constant 1 : index
    %c0_5 = arith.constant 0 : index
    %8 = vector.load %arg2[%c1, %c0_5] : memref<2x8xf32, #tpu.memory_space<vmem>>, vector<1x8xf32>
    %9 = vector.shape_cast %8 : vector<1x8xf32> to vector<8xf32>
    %10 = vector.shape_cast %2 : vector<8xf32> to vector<1x8xf32>
    tpu.vector_store %arg2[%c1, %c0_5], %10 {strides = array<i32>} : memref<2x8xf32, #tpu.memory_space<vmem>>, vector<1x8xf32>,
    return
  }
  func.func @transform_0(%arg0: i32) -> (i32, i32) {
    %c0_i32 = arith.constant 0 : i32
    %c0_i32_0 = arith.constant 0 : i32
    return %arg0, %c0_i32 : i32, i32
  }
  func.func @transform_1(%arg0: i32) -> (i32, i32) {
    %c0_i32 = arith.constant 0 : i32
    %c0_i32_0 = arith.constant 0 : i32
    return %c0_i32, %arg0 : i32, i32
  }
}

</mosaic_0001>

<llo_original>
// kernel: tpu_custom_call.1
$region0: #{tpu_custom_call.1}
  #allocation0 [shape = 'u32[]', space=smem, size = 0x4, offset = 0x4, fixed_abs, tag = 'smem constant byte address 0x4 - core index']
  #allocation1 [shape = 'u32[144,128]{1,0:T(1,128)}', space=vmem, size = 0x12000, scoped, tag = 'internal scratch']
  %s0 = inlined_call_operand.hbm [shape: f32[8,256], index: 0, kind: input, shape index: {}]
  %s1 = inlined_call_operand.hbm [shape: f32[2,8], index: 1, kind: output, shape index: {}]
  %s2 = sld [smem:[#allocation0]]
  $region18: #{tpu_custom_call.1} parent=0
    _
  %s4 = ssub.s32 1, %s2
  %s5 = scalar_select 0, %s4, %s2
  $region1: #{tpu_custom_call.1} parent=0
    #allocation2 [shape = 'u8[8192]{0}', space=vmem, size = 0x2000, scoped, tag = 'input window, operand 0, single buffered']
    #allocation3 [shape = 's32[1]{0}', space=sflag, size = 0x4, scoped, tag = 'scoped memory for tpu_custom_call.1']
    #allocation4 [shape = 's32[1]{0}', space=sflag, size = 0x4, scoped, tag = 'scoped memory for tpu_custom_call.1']
    #allocation5 [shape = 'u8[1024]{0}', space=vmem, size = 0x400, scoped, tag = 'output window, operand 0, single buffered']
    %6 = vsyncpa [#allocation3], 0
    %7 = vsyncpa [#allocation4], 0
    // Predicated region
    $region2: #{tpu_custom_call.1} parent=1 // pred_check
      _
    $region3: #{tpu_custom_call.1} parent=1 // pred_check_branch
      %9 = sbr.rel (0) target = $region5
    $region4: #{tpu_custom_call.1} parent=1 // pred_region
      %s11 = ssub.s32 256, 256
      %12 = vsyncadd [#allocation3], %s11
      %s14 = sshll.u32 [#allocation2], 4
      %s15 = int_to_ptr.vmem [resolvable:$true] %s14
      %17 = dma.hbm_to_vmem [thread:$0]  %s0, 256, %s15, [#allocation3]
    $region5: #{tpu_custom_call.1} parent=1 // pred_fallthru
      _
    // Predicated region
    $region6: #{tpu_custom_call.1} parent=1 // pred_check
      _
    $region7: #{tpu_custom_call.1} parent=1 // pred_check_branch
      %19 = sbr.rel (0) target = $region9
    $region8: #{tpu_custom_call.1} parent=1 // pred_region
      %20 = dma.done [#allocation3], 256
    $region9: #{tpu_custom_call.1} parent=1 // pred_fallthru
      _
    %v21 = vld [vmem:[#allocation2] sm:$0xff]
    %v22 = vld [vmem:[#allocation2 + $0x8] sm:$0xff]
    %v23 = vadd.f32 %v21, %v22
    %24 = vadd.xlane.f32.xlu0 %v23
    %v25 = vpop.xlane.xlu0 %24
    %v26 = vmax.f32 %v21, %v22
    %27 = vmax.xlane.f32.xlu0 %v26
    %v28 = vpop.xlane.xlu0 %27
    %v29 = vmul.f32 %v25, 0.00390625
    %v31 = vlaneseq
    %v32 = vand.u32 %v31, 127
    %v33 = vlaneseq
    %v34 = vshrl.u32 %v33, 7
    %v35 = vsub.s32 %v32, %v34
    %v36 = vrot.slane %v29, %v35
    %vm38 = vcmask 57344
    %39 = vst.msk [vmem:[#allocation5] sm:$0x1] %vm38, %v36
    %v41 = vlaneseq
    %v42 = vshrl.u32 %v41, 7
    %v43 = vsub.s32 %v32, %v42
    %v44 = vrot.slane %v28, %v43
    %46 = vst.msk [vmem:[#allocation5 + $0x1] sm:$0x1] %vm38, %v44
    // Predicated region
    $region10: #{tpu_custom_call.1} parent=1 // pred_check
      _
    $region11: #{tpu_custom_call.1} parent=1 // pred_check_branch
      %48 = sbr.rel (0) target = $region13
    $region12: #{tpu_custom_call.1} parent=1 // pred_region
      %s50 = ssub.s32 32, 32
      %51 = vsyncadd [#allocation4], %s50
      %s53 = sshll.u32 [#allocation5], 4
      %s54 = int_to_ptr.vmem [resolvable:$true] %s53
      %56 = dma.vmem_to_hbm [thread:$0]  %s54, 32, %s1, [#allocation4]
    $region13: #{tpu_custom_call.1} parent=1 // pred_fallthru
      _
    // Predicated region
    $region14: #{tpu_custom_call.1} parent=1 // pred_check
      _
    $region15: #{tpu_custom_call.1} parent=1 // pred_check_branch
      %58 = sbr.rel (0) target = $region17
    $region16: #{tpu_custom_call.1} parent=1 // pred_region
      %59 = dma.done [#allocation4], 32
    $region17: #{tpu_custom_call.1} parent=1 // pred_fallthru
      _
    %60 = vsyncpa [#allocation3], 1
    %61 = vsyncpa [#allocation4], 1

</llo_original>
